<compile_context>
chip_gen: v7x
topology: tpu7x:2x2x1
jax: 0.10.0
libtpu: 0.0.40
codegen_flags: <defaults>
</compile_context>

<pallas_src>
import jax
import jax.numpy as jnp
from jax.experimental import pallas as pl
from jax.experimental.pallas import tpu as pltpu


def _round_up(x, n):
    return ((x + n - 1) // n) * n


def _vmem_limit_bytes():
    """~75% of physical VMEM (96 MiB on v5e/v6e, 48 MiB on v7x)."""
    cap = 128 << 20
    try:
        cap = int(pltpu.get_tpu_info().vmem_capacity_bytes)
    except Exception:
        pass
    return int(cap * 3 // 4)


def _choose_tk_ff(d_model, d_ff, tm, bpe, budget):
    """None -> fused (weights resident); otherwise a d_ff reduction tile."""

    def usage(kff):
        wb = 2 * d_model * kff * bpe                # w1 + w2 slabs
        if kff < d_ff:
            wb *= 2                                  # slabs are double-buffered
        io = 2 * (tm * d_model * bpe) * 2            # x tile + out tile, 2 bufs
        hb = tm * kff * 4                            # f32 intermediate h
        acc = tm * d_model * 4 if kff < d_ff else 0  # f32 accumulator scratch
        return wb + io + hb + acc

    if usage(d_ff) <= budget:
        return None
    for kff in (4096, 2048, 1024, 512, 256, 128):    # largest slab that fits
        if kff < d_ff and d_ff % kff == 0 and usage(kff) <= budget:
            return kff
    for kff in (128, 256, 512, 1024, 2048, 4096):    # last resort: smallest divisor
        if kff < d_ff and d_ff % kff == 0:
            return kff
    return None


# ---------------------------------------------------------------------------
# Kernels
# ---------------------------------------------------------------------------

def _ffn_kernel_fused(x_ref, w1_ref, b1_ref, w2_ref, b2_ref, o_ref):
    # x_ref: (tm, d_model) token tile; both weights fully resident in VMEM.
    x = x_ref[...]
    h = jnp.dot(x, w1_ref[...], preferred_element_type=jnp.float32)
    h = jnp.maximum(h + b1_ref[...], 0.0)                     # bias + ReLU in f32
    y = jnp.dot(h.astype(w2_ref.dtype), w2_ref[...],
                preferred_element_type=jnp.float32)
    o_ref[...] = (y + b2_ref[...]).astype(o_ref.dtype)


def _ffn_kernel_splitk(x_ref, w1_ref, b1_ref, w2_ref, b2_ref, o_ref, acc_ref):
    # Reduction over d_ff slabs: w1 slab (d_model, tk_ff), w2 slab (tk_ff, d_model).
    k = pl.program_id(1)

    @pl.when(k == 0)
    def _():
        acc_ref[...] = jnp.zeros_like(acc_ref)

    x = x_ref[...]
    h = jnp.dot(x, w1_ref[...], preferred_element_type=jnp.float32)
    h = jnp.maximum(h + b1_ref[...], 0.0)                     # ReLU is per-d_ff element
    acc_ref[...] += jnp.dot(h.astype(w2_ref.dtype), w2_ref[...],
                            preferred_element_type=jnp.float32)

    @pl.when(k == pl.num_programs(1) - 1)
    def _():
        o_ref[...] = (acc_ref[...] + b2_ref[...]).astype(o_ref.dtype)


# ---------------------------------------------------------------------------
# pallas_call builder + wrapper
# ---------------------------------------------------------------------------

def _make_call(m_pad, d_model, d_ff, tm, tk_ff, out_dtype, compute_dtype,
               *, single_buffer_invariants):
    # Grid-invariant operands (index_map constant across the grid): the second
    # pipeline buffer would be pure VMEM waste -> request single buffering.
    inv = (dict(pipeline_mode=pl.Buffered(1)) if single_buffer_invariants else {})

    bpe = jnp.dtype(compute_dtype).itemsize
    cost = pl.CostEstimate(
        flops=4 * m_pad * d_model * d_ff,
        transcendentals=0,
        bytes_accessed=bpe * (2 * m_pad * d_model + 2 * d_model * d_ff)
        + 4 * (d_ff + d_model),
    )

    if tk_ff is None or tk_ff >= d_ff:
        grid_spec = pltpu.PrefetchScalarGridSpec(
            num_scalar_prefetch=0,
            grid=(m_pad // tm,),
            in_specs=[
                pl.BlockSpec((tm, d_model), lambda i: (i, 0)),               # x
                pl.BlockSpec((d_model, d_ff), lambda i: (0, 0), **inv),      # w1
                pl.BlockSpec((1, d_ff), lambda i: (0, 0), **inv),            # b1
                pl.BlockSpec((d_ff, d_model), lambda i: (0, 0), **inv),      # w2
                pl.BlockSpec((1, d_model), lambda i: (0, 0), **inv),         # b2
            ],
            out_specs=pl.BlockSpec((tm, d_model), lambda i: (i, 0)),
        )
        kernel, dims = _ffn_kernel_fused, ("parallel",)
    else:
        assert d_ff % tk_ff == 0, "tk_ff must divide d_ff"
        assert tk_ff % 128 == 0, "tk_ff must be a multiple of 128 (lane tiling)"
        grid_spec = pltpu.PrefetchScalarGridSpec(
            num_scalar_prefetch=0,
            grid=(m_pad // tm, d_ff // tk_ff),
            in_specs=[
                pl.BlockSpec((tm, d_model), lambda i, k: (i, 0)),            # x
                pl.BlockSpec((d_model, tk_ff), lambda i, k: (0, k)),         # w1 slab
                pl.BlockSpec((1, tk_ff), lambda i, k: (0, k)),               # b1 slab
                pl.BlockSpec((tk_ff, d_model), lambda i, k: (k, 0)),         # w2 slab
                pl.BlockSpec((1, d_model), lambda i, k: (0, 0), **inv),      # b2
            ],
            out_specs=pl.BlockSpec((tm, d_model), lambda i, k: (i, 0)),
            scratch_shapes=[pltpu.VMEM((tm, d_model), jnp.float32)],
        )
        kernel, dims = _ffn_kernel_splitk, ("parallel", "arbitrary")

    return pl.pallas_call(
        kernel,
        out_shape=jax.ShapeDtypeStruct((m_pad, d_model), out_dtype),
        grid_spec=grid_spec,
        compiler_params=pltpu.CompilerParams(
            dimension_semantics=dims,
            vmem_limit_bytes=_vmem_limit_bytes(),
        ),
        cost_estimate=cost,
    )


def positionwise_ffn(x, w1, b1, w2, b2, *, tm=256, tk_ff="auto",
                     compute_dtype=None):
    """Eval-mode FFN: w2(relu(w1(x)+b1))+b2.

    x: (batch, seq, d_model); w1: (d_model, d_ff); w2: (d_ff, d_model).
    tm: token row tile (multiple of 8; prefer multiples of 128 on real shapes).
    tk_ff: "auto" (default) picks a d_ff reduction tile only when the weights
        would not fit the VMEM budget; None forces the fused path; an int
        (multiple of 128 dividing d_ff) forces split-k.
    compute_dtype: matmul operand dtype (defaults to x.dtype; pass jnp.bfloat16
        to hit the v6e/v7x MXU peak; accumulation stays f32 either way).
    """
    batch, seq, d_model = x.shape
    d_ff = w1.shape[1]
    out_dtype = x.dtype
    compute_dtype = compute_dtype or x.dtype

    m = batch * seq
    x2d = x.reshape(m, d_model).astype(compute_dtype)
    w1c = w1.astype(compute_dtype)
    w2c = w2.astype(compute_dtype)
    b1_2d = b1.reshape(1, d_ff).astype(jnp.float32)
    b2_2d = b2.reshape(1, d_model).astype(jnp.float32)

    # Row tile: clamp to the (8-aligned) token count, then zero-pad the token
    # axis so any batch*seq works with a large tm (no tiny-tile fallback).
    tm = _round_up(min(tm, _round_up(m, 8)), 8)
    m_pad = _round_up(m, tm)
    if m_pad != m:
        x2d = jnp.pad(x2d, ((0, m_pad - m), (0, 0)))

    if tk_ff == "auto":
        tk_ff = _choose_tk_ff(d_model, d_ff, tm,
                              jnp.dtype(compute_dtype).itemsize,
                              budget=_vmem_limit_bytes())

    args = (x2d, w1c, b1_2d, w2c, b2_2d)
    try:
        call = _make_call(m_pad, d_model, d_ff, tm, tk_ff, out_dtype,
                          compute_dtype, single_buffer_invariants=True)
        out2d = jax.block_until_ready(call(*args))
    except Exception:
        # This JAX build rejected pipeline_mode=pl.Buffered(1); fall back to
        # default (double-buffered) specs — correctness is unchanged.
        call = _make_call(m_pad, d_model, d_ff, tm, tk_ff, out_dtype,
                          compute_dtype, single_buffer_invariants=False)
        out2d = call(*args)

    return out2d[:m].reshape(batch, seq, d_model)


# ---------------------------------------------------------------------------
# Self-test
# ---------------------------------------------------------------------------

def _init_params(key, d_model, d_ff, dtype=jnp.float32):
    """nn.Linear-style init (uniform +-1/sqrt(fan_in)); weights stored
    (in_features, out_features), i.e. transposed vs PyTorch's (out, in)."""
    k1, k2, k3, k4 = jax.random.split(key, 4)
    lim1 = 1.0 / jnp.sqrt(d_model)
    lim2 = 1.0 / jnp.sqrt(d_ff)
    w1 = jax.random.uniform(k1, (d_model, d_ff), dtype, -lim1, lim1)
    b1 = jax.random.uniform(k2, (d_ff,), dtype, -lim1, lim1)
    w2 = jax.random.uniform(k3, (d_ff, d_model), dtype, -lim2, lim2)
    b2 = jax.random.uniform(k4, (d_model,), dtype, -lim2, lim2)
    return w1, b1, w2, b2


def _ref_ffn(x, w1, b1, w2, b2):
    return jnp.maximum(x @ w1 + b1, 0.0) @ w2 + b2


if __name__ == "__main__":
    key = jax.random.PRNGKey(0)
    kx, kx2, kp, kp2 = jax.random.split(key, 4)

    # --- Test 1: fused path (weights fully resident in VMEM). ---
    batch, seq, d_model, d_ff = 2, 8, 32, 64
    x = jax.random.normal(kx, (batch, seq, d_model), jnp.float32)
    w1, b1, w2, b2 = _init_params(kp, d_model, d_ff)
    y = jax.block_until_ready(positionwise_ffn(x, w1, b1, w2, b2))
    assert y.shape == (batch, seq, d_model)
    assert jnp.allclose(y, _ref_ffn(x, w1, b1, w2, b2), atol=1e-5, rtol=1e-5), \
        "fused path mismatch"

    # --- Test 2: forced d_ff-reduction (split-k) path. ---
    d_ff2 = 256
    w1b, b1b, w2b, b2b = _init_params(kp2, d_model, d_ff2)
    y2 = jax.block_until_ready(
        positionwise_ffn(x, w1b, b1b, w2b, b2b, tk_ff=128))
    assert jnp.allclose(y2, _ref_ffn(x, w1b, b1b, w2b, b2b),
                        atol=1e-5, rtol=1e-5), "split-k path mismatch"

    # --- Test 3: ragged token count (batch*seq not a multiple of 8/tm). ---
    x3 = jax.random.normal(kx2, (2, 5, d_model), jnp.float32)
    y3 = jax.block_until_ready(positionwise_ffn(x3, w1, b1, w2, b2))
    assert jnp.allclose(y3, _ref_ffn(x3, w1, b1, w2, b2),
                        atol=1e-5, rtol=1e-5), "padded-row path mismatch"

    print("KERNEL_OK")
</pallas_src>

<mosaic_0001>
module attributes {stable_mosaic.version = 11 : i64} {
  func.func @_ffn_kernel_fused(%arg0: i32, %arg1: memref<16x32xf32, #tpu.memory_space<vmem>>, %arg2: memref<32x64xf32, #tpu.memory_space<vmem>>, %arg3: memref<1x64xf32, #tpu.memory_space<vmem>>, %arg4: memref<64x32xf32, #tpu.memory_space<vmem>>, %arg5: memref<1x32xf32, #tpu.memory_space<vmem>>, %arg6: memref<16x32xf32, #tpu.memory_space<vmem>>) attributes {dimension_semantics = [#tpu.dimension_semantics<parallel>], iteration_bounds = array<i64: 1>, scalar_prefetch = 0 : i64, scratch_operands = 0 : i64, tpu.core_type = #tpu.core_type<tc>, window_params = [{transform_indices = @transform_0, window_bounds = array<i64: 16, 32>}, {pipeline_mode = #tpu.pipeline_mode<synchronous>, transform_indices = @transform_1, window_bounds = array<i64: 32, 64>}, {pipeline_mode = #tpu.pipeline_mode<synchronous>, transform_indices = @transform_2, window_bounds = array<i64: 1, 64>}, {pipeline_mode = #tpu.pipeline_mode<synchronous>, transform_indices = @transform_3, window_bounds = array<i64: 64, 32>}, {pipeline_mode = #tpu.pipeline_mode<synchronous>, transform_indices = @transform_4, window_bounds = array<i64: 1, 32>}, {transform_indices = @transform_5, window_bounds = array<i64: 16, 32>}]} {
    %c0 = arith.constant 0 : index
    %c0_0 = arith.constant 0 : index
    %0 = vector.load %arg1[%c0, %c0_0] : memref<16x32xf32, #tpu.memory_space<vmem>>, vector<16x32xf32>
    %c0_1 = arith.constant 0 : index
    %c0_2 = arith.constant 0 : index
    %1 = vector.load %arg2[%c0_1, %c0_2] : memref<32x64xf32, #tpu.memory_space<vmem>>, vector<32x64xf32>
    %cst = arith.constant dense<0.000000e+00> : vector<16x64xf32>
    %2 = tpu.matmul %0, %1, %cst {dimension_numbers = #tpu.dot_dimension_numbers<[1], [0], [0], [1], [0, 0, 1, 1], [], []>} : vector<16x32xf32>, vector<32x64xf32>, vector<16x64xf32> -> vector<16x64xf32>
    %c0_3 = arith.constant 0 : index
    %c0_4 = arith.constant 0 : index
    %3 = vector.load %arg3[%c0_3, %c0_4] : memref<1x64xf32, #tpu.memory_space<vmem>>, vector<1x64xf32>
    %4 = vector.broadcast %3 : vector<1x64xf32> to vector<16x64xf32>
    %5 = arith.addf %2, %4 : vector<16x64xf32>
    %cst_5 = arith.constant 0.000000e+00 : f32
    %6 = vector.broadcast %cst_5 : f32 to vector<16x64xf32>
    %7 = arith.maximumf %5, %6 : vector<16x64xf32>
    %c0_6 = arith.constant 0 : index
    %c0_7 = arith.constant 0 : index
    %8 = vector.load %arg4[%c0_6, %c0_7] : memref<64x32xf32, #tpu.memory_space<vmem>>, vector<64x32xf32>
    %cst_8 = arith.constant dense<0.000000e+00> : vector<16x32xf32>
    %9 = tpu.matmul %7, %8, %cst_8 {dimension_numbers = #tpu.dot_dimension_numbers<[1], [0], [0], [1], [0, 0, 1, 1], [], []>} : vector<16x64xf32>, vector<64x32xf32>, vector<16x32xf32> -> vector<16x32xf32>
    %c0_9 = arith.constant 0 : index
    %c0_10 = arith.constant 0 : index
    %10 = vector.load %arg5[%c0_9, %c0_10] : memref<1x32xf32, #tpu.memory_space<vmem>>, vector<1x32xf32>
    %11 = vector.broadcast %10 : vector<1x32xf32> to vector<16x32xf32>
    %12 = arith.addf %9, %11 : vector<16x32xf32>
    %c0_11 = arith.constant 0 : index
    %c0_12 = arith.constant 0 : index
    %13 = vector.load %arg6[%c0_11, %c0_12] : memref<16x32xf32, #tpu.memory_space<vmem>>, vector<16x32xf32>
    tpu.vector_store %arg6[%c0_11, %c0_12], %12 {strides = array<i32>} : memref<16x32xf32, #tpu.memory_space<vmem>>, vector<16x32xf32>,
    return
  }
  func.func @transform_0(%arg0: i32) -> (i32, i32) {
    %c0_i32 = arith.constant 0 : i32
    %c0_i32_0 = arith.constant 0 : i32
    return %arg0, %c0_i32 : i32, i32
  }
  func.func @transform_1(%arg0: i32) -> (i32, i32) {
    %c0_i32 = arith.constant 0 : i32
    %c0_i32_0 = arith.constant 0 : i32
    %c0_i32_1 = arith.constant 0 : i32
    return %c0_i32, %c0_i32_0 : i32, i32
  }
  func.func @transform_2(%arg0: i32) -> (i32, i32) {
    %c0_i32 = arith.constant 0 : i32
    %c0_i32_0 = arith.constant 0 : i32
    %c0_i32_1 = arith.constant 0 : i32
    return %c0_i32, %c0_i32_0 : i32, i32
  }
  func.func @transform_3(%arg0: i32) -> (i32, i32) {
    %c0_i32 = arith.constant 0 : i32
    %c0_i32_0 = arith.constant 0 : i32
    %c0_i32_1 = arith.constant 0 : i32
    return %c0_i32, %c0_i32_0 : i32, i32
  }
  func.func @transform_4(%arg0: i32) -> (i32, i32) {
    %c0_i32 = arith.constant 0 : i32
    %c0_i32_0 = arith.constant 0 : i32
    %c0_i32_1 = arith.constant 0 : i32
    return %c0_i32, %c0_i32_0 : i32, i32
  }
  func.func @transform_5(%arg0: i32) -> (i32, i32) {
    %c0_i32 = arith.constant 0 : i32
    %c0_i32_0 = arith.constant 0 : i32
    return %arg0, %c0_i32 : i32, i32
  }
}

module attributes {stable_mosaic.version = 11 : i64} {
  func.func @_ffn_kernel_fused(%arg0: i32, %arg1: memref<16x32xf32, #tpu.memory_space<vmem>>, %arg2: memref<32x64xf32, #tpu.memory_space<vmem>>, %arg3: memref<1x64xf32, #tpu.memory_space<vmem>>, %arg4: memref<64x32xf32, #tpu.memory_space<vmem>>, %arg5: memref<1x32xf32, #tpu.memory_space<vmem>>, %arg6: memref<16x32xf32, #tpu.memory_space<vmem>>) attributes {dimension_semantics = [#tpu.dimension_semantics<parallel>], iteration_bounds = array<i64: 1>, scalar_prefetch = 0 : i64, scratch_operands = 0 : i64, tpu.core_type = #tpu.core_type<tc>, window_params = [{transform_indices = @transform_0, window_bounds = array<i64: 16, 32>}, {pipeline_mode = #tpu.pipeline_mode<synchronous>, transform_indices = @transform_1, window_bounds = array<i64: 32, 64>}, {pipeline_mode = #tpu.pipeline_mode<synchronous>, transform_indices = @transform_2, window_bounds = array<i64: 1, 64>}, {pipeline_mode = #tpu.pipeline_mode<synchronous>, transform_indices = @transform_3, window_bounds = array<i64: 64, 32>}, {pipeline_mode = #tpu.pipeline_mode<synchronous>, transform_indices = @transform_4, window_bounds = array<i64: 1, 32>}, {transform_indices = @transform_5, window_bounds = array<i64: 16, 32>}]} {
    %c0 = arith.constant 0 : index
    %c0_0 = arith.constant 0 : index
    %0 = vector.load %arg1[%c0, %c0_0] : memref<16x32xf32, #tpu.memory_space<vmem>>, vector<16x32xf32>
    %c0_1 = arith.constant 0 : index
    %c0_2 = arith.constant 0 : index
    %1 = vector.load %arg2[%c0_1, %c0_2] : memref<32x64xf32, #tpu.memory_space<vmem>>, vector<32x64xf32>
    %cst = arith.constant dense<0.000000e+00> : vector<16x64xf32>
    %2 = tpu.matmul %0, %1, %cst {dimension_numbers = #tpu.dot_dimension_numbers<[1], [0], [0], [1], [0, 0, 1, 1], [], []>} : vector<16x32xf32>, vector<32x64xf32>, vector<16x64xf32> -> vector<16x64xf32>
    %c0_3 = arith.constant 0 : index
    %c0_4 = arith.constant 0 : index
    %3 = vector.load %arg3[%c0_3, %c0_4] : memref<1x64xf32, #tpu.memory_space<vmem>>, vector<1x64xf32>
    %4 = vector.broadcast %3 : vector<1x64xf32> to vector<16x64xf32>
    %5 = arith.addf %2, %4 : vector<16x64xf32>
    %cst_5 = arith.constant 0.000000e+00 : f32
    %6 = vector.broadcast %cst_5 : f32 to vector<16x64xf32>
    %7 = arith.maximumf %5, %6 : vector<16x64xf32>
    %c0_6 = arith.constant 0 : index
    %c0_7 = arith.constant 0 : index
    %8 = vector.load %arg4[%c0_6, %c0_7] : memref<64x32xf32, #tpu.memory_space<vmem>>, vector<64x32xf32>
    %cst_8 = arith.constant dense<0.000000e+00> : vector<16x32xf32>
    %9 = tpu.matmul %7, %8, %cst_8 {dimension_numbers = #tpu.dot_dimension_numbers<[1], [0], [0], [1], [0, 0, 1, 1], [], []>} : vector<16x64xf32>, vector<64x32xf32>, vector<16x32xf32> -> vector<16x32xf32>
    %c0_9 = arith.constant 0 : index
    %c0_10 = arith.constant 0 : index
    %10 = vector.load %arg5[%c0_9, %c0_10] : memref<1x32xf32, #tpu.memory_space<vmem>>, vector<1x32xf32>
    %11 = vector.broadcast %10 : vector<1x32xf32> to vector<16x32xf32>
    %12 = arith.addf %9, %11 : vector<16x32xf32>
    %c0_11 = arith.constant 0 : index
    %c0_12 = arith.constant 0 : index
    %13 = vector.load %arg6[%c0_11, %c0_12] : memref<16x32xf32, #tpu.memory_space<vmem>>, vector<16x32xf32>
    tpu.vector_store %arg6[%c0_11, %c0_12], %12 {strides = array<i32>} : memref<16x32xf32, #tpu.memory_space<vmem>>, vector<16x32xf32>,
    return
  }
  func.func @transform_0(%arg0: i32) -> (i32, i32) {
    %c0_i32 = arith.constant 0 : i32
    %c0_i32_0 = arith.constant 0 : i32
    return %arg0, %c0_i32 : i32, i32
  }
  func.func @transform_1(%arg0: i32) -> (i32, i32) {
    %c0_i32 = arith.constant 0 : i32
    %c0_i32_0 = arith.constant 0 : i32
    %c0_i32_1 = arith.constant 0 : i32
    return %c0_i32, %c0_i32_0 : i32, i32
  }
  func.func @transform_2(%arg0: i32) -> (i32, i32) {
    %c0_i32 = arith.constant 0 : i32
    %c0_i32_0 = arith.constant 0 : i32
    %c0_i32_1 = arith.constant 0 : i32
    return %c0_i32, %c0_i32_0 : i32, i32
  }
  func.func @transform_3(%arg0: i32) -> (i32, i32) {
    %c0_i32 = arith.constant 0 : i32
    %c0_i32_0 = arith.constant 0 : i32
    %c0_i32_1 = arith.constant 0 : i32
    return %c0_i32, %c0_i32_0 : i32, i32
  }
  func.func @transform_4(%arg0: i32) -> (i32, i32) {
    %c0_i32 = arith.constant 0 : i32
    %c0_i32_0 = arith.constant 0 : i32
    %c0_i32_1 = arith.constant 0 : i32
    return %c0_i32, %c0_i32_0 : i32, i32
  }
  func.func @transform_5(%arg0: i32) -> (i32, i32) {
    %c0_i32 = arith.constant 0 : i32
    %c0_i32_0 = arith.constant 0 : i32
    return %arg0, %c0_i32 : i32, i32
  }
}

</mosaic_0001>

<llo_original>
// kernel: tpu_custom_call.1
$region0: #{tpu_custom_call.1}
  #allocation0 [shape = 'u32[]', space=smem, size = 0x4, offset = 0x4, fixed_abs, tag = 'smem constant byte address 0x4 - core index']
  #allocation1 [shape = 'u32[144,128]{1,0:T(1,128)}', space=vmem, size = 0x12000, scoped, tag = 'internal scratch']
  %s0 = inlined_call_operand.hbm [shape: f32[16,32], index: 0, kind: input, shape index: {}]
  %s1 = inlined_call_operand.hbm [shape: f32[32,64], index: 1, kind: input, shape index: {}]
  %s2 = inlined_call_operand.hbm [shape: f32[1,64], index: 2, kind: input, shape index: {}]
  %s3 = inlined_call_operand.hbm [shape: f32[64,32], index: 3, kind: input, shape index: {}]
  %s4 = inlined_call_operand.hbm [shape: f32[1,32], index: 4, kind: input, shape index: {}]
  %s5 = inlined_call_operand.hbm [shape: f32[16,32], index: 5, kind: output, shape index: {}]
  %s6 = sld [smem:[#allocation0]]
  $region50: #{tpu_custom_call.1} parent=0
    _
  %s8 = ssub.s32 1, %s6
  %s9 = scalar_select 0, %s8, %s6
  $region1: #{tpu_custom_call.1} parent=0
    #allocation2 [shape = 'u8[8192]{0}', space=vmem, size = 0x2000, scoped, tag = 'input window, operand 0, single buffered']
    #allocation3 [shape = 's32[1]{0}', space=sflag, size = 0x4, scoped, tag = 'scoped memory for tpu_custom_call.1']
    #allocation4 [shape = 's32[1]{0}', space=sflag, size = 0x4, scoped, tag = 'scoped memory for tpu_custom_call.1']
    #allocation5 [shape = 'u8[16384]{0}', space=vmem, size = 0x4000, scoped, tag = 'input window, operand 1, single buffered']
    #allocation6 [shape = 's32[1]{0}', space=sflag, size = 0x4, scoped, tag = 'scoped memory for tpu_custom_call.1']
    #allocation7 [shape = 'u8[512]{0}', space=vmem, size = 0x400, scoped, tag = 'input window, operand 2, single buffered']
    #allocation8 [shape = 'u8[32768]{0}', space=vmem, size = 0x8000, scoped, tag = 'input window, operand 3, single buffered']
    #allocation9 [shape = 's32[1]{0}', space=sflag, size = 0x4, scoped, tag = 'scoped memory for tpu_custom_call.1']
    #allocation10 [shape = 'u8[512]{0}', space=vmem, size = 0x400, scoped, tag = 'input window, operand 4, single buffered']
    #allocation11 [shape = 'u8[8192]{0}', space=vmem, size = 0x2000, scoped, tag = 'output window, operand 0, single buffered']
    %10 = vsyncpa [#allocation3], 0
    %11 = vsyncpa [#allocation6], 0
    %12 = vsyncpa [#allocation9], 0
    %13 = vsyncpa [#allocation4], 0
    // Predicated region
    $region2: #{tpu_custom_call.1} parent=1 // pred_check
      _
    $region3: #{tpu_custom_call.1} parent=1 // pred_check_branch
      %15 = sbr.rel (0) target = $region5
    $region4: #{tpu_custom_call.1} parent=1 // pred_region
      %s17 = ssub.s32 256, 256
      %18 = vsyncadd [#allocation3], %s17
      %s19 = sshll.u32 [#allocation2], 4
      %s20 = int_to_ptr.vmem [resolvable:$true] %s19
      %25 = dma.hbm_to_vmem [thread:$0]  %s0, 256, %s20, [#allocation3], 128, 128, 8
    $region5: #{tpu_custom_call.1} parent=1 // pred_fallthru
      _
    // Predicated region
    $region6: #{tpu_custom_call.1} parent=1 // pred_check
      _
    $region7: #{tpu_custom_call.1} parent=1 // pred_check_branch
      %27 = sbr.rel (0) target = $region9
    $region8: #{tpu_custom_call.1} parent=1 // pred_region
      %s29 = ssub.s32 512, 512
      %30 = vsyncadd [#allocation6], %s29
      %s31 = sshll.u32 [#allocation5], 4
      %s32 = int_to_ptr.vmem [resolvable:$true] %s31
      %37 = dma.hbm_to_vmem [thread:$0]  %s1, 512, %s32, [#allocation6], 128, 128, 8
    $region9: #{tpu_custom_call.1} parent=1 // pred_fallthru
      _
    // Predicated region
    $region10: #{tpu_custom_call.1} parent=1 // pred_check
      _
    $region11: #{tpu_custom_call.1} parent=1 // pred_check_branch
      %39 = sbr.rel (0) target = $region13
    $region12: #{tpu_custom_call.1} parent=1 // pred_region
      %s41 = ssub.s32 16, 16
      %42 = vsyncadd [#allocation6], %s41
      %s44 = sshll.u32 [#allocation7], 4
      %s45 = int_to_ptr.vmem [resolvable:$true] %s44
      %47 = dma.hbm_to_vmem [thread:$0]  %s2, 16, %s45, [#allocation6]
    $region13: #{tpu_custom_call.1} parent=1 // pred_fallthru
      _
    // Predicated region
    $region14: #{tpu_custom_call.1} parent=1 // pred_check
      _
    $region15: #{tpu_custom_call.1} parent=1 // pred_check_branch
      %49 = sbr.rel (0) target = $region17
    $region16: #{tpu_custom_call.1} parent=1 // pred_region
      %s51 = ssub.s32 1024, 1024
      %52 = vsyncadd [#allocation9], %s51
      %s53 = sshll.u32 [#allocation8], 4
      %s54 = int_to_ptr.vmem [resolvable:$true] %s53
      %59 = dma.hbm_to_vmem [thread:$0]  %s3, 1024, %s54, [#allocation9], 128, 128, 8
    $region17: #{tpu_custom_call.1} parent=1 // pred_fallthru
      _
    // Predicated region
    $region18: #{tpu_custom_call.1} parent=1 // pred_check
      _
    $region19: #{tpu_custom_call.1} parent=1 // pred_check_branch
      %61 = sbr.rel (0) target = $region21
    $region20: #{tpu_custom_call.1} parent=1 // pred_region
      %s63 = ssub.s32 16, 16
      %64 = vsyncadd [#allocation9], %s63
      %s66 = sshll.u32 [#allocation10], 4
      %s67 = int_to_ptr.vmem [resolvable:$true] %s66
      %69 = dma.hbm_to_vmem [thread:$0]  %s4, 16, %s67, [#allocation9]
    $region21: #{tpu_custom_call.1} parent=1 // pred_fallthru
      _
    // Predicated region
    $region22: #{tpu_custom_call.1} parent=1 // pred_check
      _
    $region23: #{tpu_custom_call.1} parent=1 // pred_check_branch
      %71 = sbr.rel (0) target = $region25
    $region24: #{tpu_custom_call.1} parent=1 // pred_region
      %72 = dma.done [#allocation3], 256
    $region25: #{tpu_custom_call.1} parent=1 // pred_fallthru
      _
    // Predicated region
    $region26: #{tpu_custom_call.1} parent=1 // pred_check
      _
    $region27: #{tpu_custom_call.1} parent=1 // pred_check_branch
      %74 = sbr.rel (0) target = $region29
    $region28: #{tpu_custom_call.1} parent=1 // pred_region
      %75 = dma.done [#allocation6], 512
    $region29: #{tpu_custom_call.1} parent=1 // pred_fallthru
      _
    // Predicated region
    $region30: #{tpu_custom_call.1} parent=1 // pred_check
      _
    $region31: #{tpu_custom_call.1} parent=1 // pred_check_branch
      %77 = sbr.rel (0) target = $region33
    $region32: #{tpu_custom_call.1} parent=1 // pred_region
      %78 = dma.done [#allocation6], 16
    $region33: #{tpu_custom_call.1} parent=1 // pred_fallthru
      _
    // Predicated region
    $region34: #{tpu_custom_call.1} parent=1 // pred_check
      _
    $region35: #{tpu_custom_call.1} parent=1 // pred_check_branch
      %80 = sbr.rel (0) target = $region37
    $region36: #{tpu_custom_call.1} parent=1 // pred_region
      %81 = dma.done [#allocation9], 1024
    $region37: #{tpu_custom_call.1} parent=1 // pred_fallthru
      _
    // Predicated region
    $region38: #{tpu_custom_call.1} parent=1 // pred_check
      _
    $region39: #{tpu_custom_call.1} parent=1 // pred_check_branch
      %83 = sbr.rel (0) target = $region41
    $region40: #{tpu_custom_call.1} parent=1 // pred_region
      %84 = dma.done [#allocation9], 16
    $region41: #{tpu_custom_call.1} parent=1 // pred_fallthru
      _
    %v85 = vld [vmem:[#allocation2] sm:$0xff]
    %v86 = vld [vmem:[#allocation2 + $0x8] sm:$0xff]
    %v87 = vld [vmem:[#allocation5] sm:$0xff]
    %v88 = vld [vmem:[#allocation5 + $0x8] sm:$0xff]
    %v89 = vld [vmem:[#allocation5 + $0x10] sm:$0xff]
    %v90 = vld [vmem:[#allocation5 + $0x18] sm:$0xff]
    %v91 = vld [vmem:[#allocation7] sm:$0x1]
    %v93 = vlaneseq
    %v94 = vshrl.u32 %v93, 7
    %v95 = vsub.s32 0, %v94
    %v96 = vrot.slane %v91, %v95
    %vm98 = vcmask 261120
    %v100 = vsel %vm98, %v85, 0
    %v103 = vsel %vm98, %v86, 0
    %105 = vmatprep.subr.mxu0 0.0
    %106 = vmatpush1.msra.mxu0 %v87
    %107 = vmatprep.subr.mxu0 0.0
    %108 = vmatpush1.msra.mxu0 %v88
    %109 = vmatprep.subr.mxu0 0.0
    %110 = vmatpush1.msra.mxu0 %v89
    %111 = vmatprep.subr.mxu0 0.0
    %112 = vmatpush1.msra.mxu0 %v90
    %113 = vmatprep.subr.mxu0 0.0
    %114 = vmatpush1.msra.mxu0 0.0
    %115 = vmatprep.subr.mxu0 0.0
    %116 = vmatpush1.msra.mxu0 0.0
    %117 = vmatprep.subr.mxu0 0.0
    %118 = vmatpush1.msra.mxu0 0.0
    %119 = vmatprep.subr.mxu0 0.0
    %120 = vmatpush1.msra.mxu0 0.0
    %121 = vmatprep.subr.mxu0 0.0
    %122 = vmatpush1.msra.mxu0 0.0
    %123 = vmatprep.subr.mxu0 0.0
    %124 = vmatpush1.msra.mxu0 0.0
    %125 = vmatprep.subr.mxu0 0.0
    %126 = vmatpush1.msra.mxu0 0.0
    %127 = vmatprep.subr.mxu0 0.0
    %128 = vmatpush1.msra.mxu0 0.0
    %129 = vmatprep.subr.mxu0 0.0
    %130 = vmatpush1.msra.mxu0 0.0
    %131 = vmatprep.subr.mxu0 0.0
    %132 = vmatpush1.msra.mxu0 0.0
    %133 = vmatprep.subr.mxu0 0.0
    %134 = vmatpush1.msra.mxu0 0.0
    %135 = vmatprep.subr.mxu0 0.0
    %136 = vmatpush1.msra.mxu0 0.0
    %137 = vmatprep.subr.mxu0 0.0
    %138 = vmatpush1.msra.mxu0 0.0
    %139 = vmatprep.subr.mxu0 0.0
    %140 = vmatpush1.msra.mxu0 0.0
    %141 = vmatprep.subr.mxu0 0.0
    %142 = vmatpush1.msra.mxu0 0.0
    %143 = vmatprep.subr.mxu0 0.0
    %144 = vmatpush1.msra.mxu0 0.0
    %145 = vmatprep.subr.mxu0 0.0
    %146 = vmatpush1.msra.mxu0 0.0
    %147 = vmatprep.subr.mxu0 0.0
    %148 = vmatpush1.msra.mxu0 0.0
    %149 = vmatprep.subr.mxu0 0.0
    %150 = vmatpush1.msra.mxu0 0.0
    %151 = vmatprep.subr.mxu0 0.0
    %152 = vmatpush1.msra.mxu0 0.0
    %153 = vmatprep.subr.mxu0 0.0
    %154 = vmatpush1.msra.mxu0 0.0
    %155 = vmatprep.subr.mxu0 0.0
    %156 = vmatpush1.msra.mxu0 0.0
    %157 = vmatprep.subr.mxu0 0.0
    %158 = vmatpush1.msra.mxu0 0.0
    %159 = vmatprep.subr.mxu0 0.0
    %160 = vmatpush1.msra.mxu0 0.0
    %161 = vmatprep.subr.mxu0 0.0
    %162 = vmatpush1.msra.mxu0 0.0
    %163 = vmatprep.subr.mxu0 0.0
    %164 = vmatpush1.msra.mxu0 0.0
    %165 = vmatprep.subr.mxu0 0.0
    %166 = vmatpush1.msra.mxu0 0.0
    %167 = vmatprep.subr.mxu0 0.0
    %168 = vmatpush1.msra.mxu0 0.0
    %169 = vmatprep.mubr.f32.mxu0 0.0
    %170 = vmatmul.mubr.f32.gmra.mrb[0].mxu0 %v100
    %v171 = vpop.f32.mrb[0].mxu0
    %v172 = vadd.f32 %v96, %v171
    %v173 = vpop.f32.mrb[0].mxu0
    %174 = vmatprep.mubr.f32.mxu0 0.0
    %175 = vmatmul.mubr.f32.gmra.mrb[0].mxu0 %v103
    %v176 = vpop.f32.mrb[0].mxu0
    %v177 = vadd.f32 %v96, %v176
    %v178 = vpop.f32.mrb[0].mxu0
    %179 = vdwg.mxu0
    %v180 = vmax.f32 %v172, 0.0
    %v181 = vmax.f32 %v177, 0.0
    %v182 = vld [vmem:[#allocation8] sm:$0xff]
    %v183 = vld [vmem:[#allocation8 + $0x8] sm:$0xff]
    %v184 = vld [vmem:[#allocation8 + $0x10] sm:$0xff]
    %v185 = vld [vmem:[#allocation8 + $0x18] sm:$0xff]
    %v186 = vld [vmem:[#allocation8 + $0x20] sm:$0xff]
    %v187 = vld [vmem:[#allocation8 + $0x28] sm:$0xff]
    %v188 = vld [vmem:[#allocation8 + $0x30] sm:$0xff]
    %v189 = vld [vmem:[#allocation8 + $0x38] sm:$0xff]
    %v190 = vld [vmem:[#allocation10] sm:$0x1]
    %v192 = vlaneseq
    %v193 = vshrl.u32 %v192, 7
    %v194 = vsub.s32 0, %v193
    %v195 = vrot.slane %v190, %v194
    %vm197 = vcmask 523264
    %v199 = vsel %vm197, %v180, 0
    %v202 = vsel %vm197, %v181, 0
    %204 = vmatprep.subr.mxu0 0.0
    %205 = vmatpush1.msra.mxu0 %v182
    %206 = vmatprep.subr.mxu0 0.0
    %207 = vmatpush1.msra.mxu0 %v183
    %208 = vmatprep.subr.mxu0 0.0
    %209 = vmatpush1.msra.mxu0 %v184
    %210 = vmatprep.subr.mxu0 0.0
    %211 = vmatpush1.msra.mxu0 %v185
    %212 = vmatprep.subr.mxu0 0.0
    %213 = vmatpush1.msra.mxu0 %v186
    %214 = vmatprep.subr.mxu0 0.0
    %215 = vmatpush1.msra.mxu0 %v187
    %216 = vmatprep.subr.mxu0 0.0
    %217 = vmatpush1.msra.mxu0 %v188
    %218 = vmatprep.subr.mxu0 0.0
    %219 = vmatpush1.msra.mxu0 %v189
    %220 = vmatprep.subr.mxu0 0.0
    %221 = vmatpush1.msra.mxu0 0.0
    %222 = vmatprep.subr.mxu0 0.0
    %223 = vmatpush1.msra.mxu0 0.0
    %224 = vmatprep.subr.mxu0 0.0
    %225 = vmatpush1.msra.mxu0 0.0
    %226 = vmatprep.subr.mxu0 0.0
    %227 = vmatpush1.msra.mxu0 0.0
    %228 = vmatprep.subr.mxu0 0.0
    %229 = vmatpush1.msra.mxu0 0.0
    %230 = vmatprep.subr.mxu0 0.0
    %231 = vmatpush1.msra.mxu0 0.0
    %232 = vmatprep.subr.mxu0 0.0
    %233 = vmatpush1.msra.mxu0 0.0
    %234 = vmatprep.subr.mxu0 0.0
    %235 = vmatpush1.msra.mxu0 0.0
    %236 = vmatprep.subr.mxu0 0.0
    %237 = vmatpush1.msra.mxu0 0.0
    %238 = vmatprep.subr.mxu0 0.0
    %239 = vmatpush1.msra.mxu0 0.0
    %240 = vmatprep.subr.mxu0 0.0
    %241 = vmatpush1.msra.mxu0 0.0
    %242 = vmatprep.subr.mxu0 0.0
    %243 = vmatpush1.msra.mxu0 0.0
    %244 = vmatprep.subr.mxu0 0.0
    %245 = vmatpush1.msra.mxu0 0.0
    %246 = vmatprep.subr.mxu0 0.0
    %247 = vmatpush1.msra.mxu0 0.0
    %248 = vmatprep.subr.mxu0 0.0
    %249 = vmatpush1.msra.mxu0 0.0
    %250 = vmatprep.subr.mxu0 0.0
    %251 = vmatpush1.msra.mxu0 0.0
    %252 = vmatprep.subr.mxu0 0.0
    %253 = vmatpush1.msra.mxu0 0.0
    %254 = vmatprep.subr.mxu0 0.0
    %255 = vmatpush1.msra.mxu0 0.0
    %256 = vmatprep.subr.mxu0 0.0
    %257 = vmatpush1.msra.mxu0 0.0
    %258 = vmatprep.subr.mxu0 0.0
    %259 = vmatpush1.msra.mxu0 0.0
    %260 = vmatprep.subr.mxu0 0.0
    %261 = vmatpush1.msra.mxu0 0.0
    %262 = vmatprep.subr.mxu0 0.0
    %263 = vmatpush1.msra.mxu0 0.0
    %264 = vmatprep.subr.mxu0 0.0
    %265 = vmatpush1.msra.mxu0 0.0
    %266 = vmatprep.subr.mxu0 0.0
    %267 = vmatpush1.msra.mxu0 0.0
    %268 = vmatprep.mubr.f32.mxu0 0.0
    %269 = vmatmul.mubr.f32.gmra.mrb[0].mxu0 %v199
    %v270 = vpop.f32.mrb[0].mxu0
    %v271 = vadd.f32 %v195, %v270
    %v272 = vpop.f32.mrb[0].mxu0
    %273 = vmatprep.mubr.f32.mxu0 0.0
    %274 = vmatmul.mubr.f32.gmra.mrb[0].mxu0 %v202
    %v275 = vpop.f32.mrb[0].mxu0
    %v276 = vadd.f32 %v195, %v275
    %v277 = vpop.f32.mrb[0].mxu0
    %278 = vdwg.mxu0
    %279 = vst.msk [vmem:[#allocation11] sm:$0xff] %vm98, %v271
    %280 = vst.msk [vmem:[#allocation11 + $0x8] sm:$0xff] %vm98, %v276
    // Predicated region
    $region42: #{tpu_custom_call.1} parent=1 // pred_check
      _
    $region43: #{tpu_custom_call.1} parent=1 // pred_check_branch
      %282 = sbr.rel (0) target = $region45
    $region44: #{tpu_custom_call.1} parent=1 // pred_region
      %s284 = ssub.s32 256, 256
      %285 = vsyncadd [#allocation4], %s284
      %s286 = sshll.u32 [#allocation11], 4
      %s287 = int_to_ptr.vmem [resolvable:$true] %s286
      %292 = dma.vmem_to_hbm [thread:$0]  %s287, 256, %s5, [#allocation4], 128, 128, 8
    $region45: #{tpu_custom_call.1} parent=1 // pred_fallthru
      _
    // Predicated region
    $region46: #{tpu_custom_call.1} parent=1 // pred_check
      _
    $region47: #{tpu_custom_call.1} parent=1 // pred_check_branch
      %294 = sbr.rel (0) target = $region49
    $region48: #{tpu_custom_call.1} parent=1 // pred_region
      %295 = dma.done [#allocation4], 256
    $region49: #{tpu_custom_call.1} parent=1 // pred_fallthru
      _
    %296 = vsyncpa [#allocation3], 1
    %297 = vsyncpa [#allocation6], 1
    %298 = vsyncpa [#allocation9], 1
    %299 = vsyncpa [#allocation4], 1

// kernel: tpu_custom_call.1
$region0: #{tpu_custom_call.1}
  #allocation0 [shape = 'u32[]', space=smem, size = 0x4, offset = 0x4, fixed_abs, tag = 'smem constant byte address 0x4 - core index']
  #allocation1 [shape = 'u32[144,128]{1,0:T(1,128)}', space=vmem, size = 0x12000, scoped, tag = 'internal scratch']
  %s0 = inlined_call_operand.hbm [shape: f32[16,32], index: 0, kind: input, shape index: {}]
  %s1 = inlined_call_operand.hbm [shape: f32[32,64], index: 1, kind: input, shape index: {}]
  %s2 = inlined_call_operand.hbm [shape: f32[1,64], index: 2, kind: input, shape index: {}]
  %s3 = inlined_call_operand.hbm [shape: f32[64,32], index: 3, kind: input, shape index: {}]
  %s4 = inlined_call_operand.hbm [shape: f32[1,32], index: 4, kind: input, shape index: {}]
  %s5 = inlined_call_operand.hbm [shape: f32[16,32], index: 5, kind: output, shape index: {}]
  %s6 = sld [smem:[#allocation0]]
  $region50: #{tpu_custom_call.1} parent=0
    _
  %s8 = ssub.s32 1, %s6
  %s9 = scalar_select 0, %s8, %s6
  $region1: #{tpu_custom_call.1} parent=0
    #allocation2 [shape = 'u8[8192]{0}', space=vmem, size = 0x2000, scoped, tag = 'input window, operand 0, single buffered']
    #allocation3 [shape = 's32[1]{0}', space=sflag, size = 0x4, scoped, tag = 'scoped memory for tpu_custom_call.1']
    #allocation4 [shape = 's32[1]{0}', space=sflag, size = 0x4, scoped, tag = 'scoped memory for tpu_custom_call.1']
    #allocation5 [shape = 'u8[16384]{0}', space=vmem, size = 0x4000, scoped, tag = 'input window, operand 1, single buffered']
    #allocation6 [shape = 's32[1]{0}', space=sflag, size = 0x4, scoped, tag = 'scoped memory for tpu_custom_call.1']
    #allocation7 [shape = 'u8[512]{0}', space=vmem, size = 0x400, scoped, tag = 'input window, operand 2, single buffered']
    #allocation8 [shape = 'u8[32768]{0}', space=vmem, size = 0x8000, scoped, tag = 'input window, operand 3, single buffered']
    #allocation9 [shape = 's32[1]{0}', space=sflag, size = 0x4, scoped, tag = 'scoped memory for tpu_custom_call.1']
    #allocation10 [shape = 'u8[512]{0}', space=vmem, size = 0x400, scoped, tag = 'input window, operand 4, single buffered']
    #allocation11 [shape = 'u8[8192]{0}', space=vmem, size = 0x2000, scoped, tag = 'output window, operand 0, single buffered']
    %10 = vsyncpa [#allocation3], 0
    %11 = vsyncpa [#allocation6], 0
    %12 = vsyncpa [#allocation9], 0
    %13 = vsyncpa [#allocation4], 0
    // Predicated region
    $region2: #{tpu_custom_call.1} parent=1 // pred_check
      _
    $region3: #{tpu_custom_call.1} parent=1 // pred_check_branch
      %15 = sbr.rel (0) target = $region5
    $region4: #{tpu_custom_call.1} parent=1 // pred_region
      %s17 = ssub.s32 256, 256
      %18 = vsyncadd [#allocation3], %s17
      %s19 = sshll.u32 [#allocation2], 4
      %s20 = int_to_ptr.vmem [resolvable:$true] %s19
      %25 = dma.hbm_to_vmem [thread:$0]  %s0, 256, %s20, [#allocation3], 128, 128, 8
    $region5: #{tpu_custom_call.1} parent=1 // pred_fallthru
      _
    // Predicated region
    $region6: #{tpu_custom_call.1} parent=1 // pred_check
      _
    $region7: #{tpu_custom_call.1} parent=1 // pred_check_branch
      %27 = sbr.rel (0) target = $region9
    $region8: #{tpu_custom_call.1} parent=1 // pred_region
      %s29 = ssub.s32 512, 512
      %30 = vsyncadd [#allocation6], %s29
      %s31 = sshll.u32 [#allocation5], 4
      %s32 = int_to_ptr.vmem [resolvable:$true] %s31
      %37 = dma.hbm_to_vmem [thread:$0]  %s1, 512, %s32, [#allocation6], 128, 128, 8
    $region9: #{tpu_custom_call.1} parent=1 // pred_fallthru
      _
    // Predicated region
    $region10: #{tpu_custom_call.1} parent=1 // pred_check
      _
    $region11: #{tpu_custom_call.1} parent=1 // pred_check_branch
      %39 = sbr.rel (0) target = $region13
    $region12: #{tpu_custom_call.1} parent=1 // pred_region
      %s41 = ssub.s32 16, 16
      %42 = vsyncadd [#allocation6], %s41
      %s44 = sshll.u32 [#allocation7], 4
      %s45 = int_to_ptr.vmem [resolvable:$true] %s44
      %47 = dma.hbm_to_vmem [thread:$0]  %s2, 16, %s45, [#allocation6]
    $region13: #{tpu_custom_call.1} parent=1 // pred_fallthru
      _
    // Predicated region
    $region14: #{tpu_custom_call.1} parent=1 // pred_check
      _
    $region15: #{tpu_custom_call.1} parent=1 // pred_check_branch
      %49 = sbr.rel (0) target = $region17
    $region16: #{tpu_custom_call.1} parent=1 // pred_region
      %s51 = ssub.s32 1024, 1024
      %52 = vsyncadd [#allocation9], %s51
      %s53 = sshll.u32 [#allocation8], 4
      %s54 = int_to_ptr.vmem [resolvable:$true] %s53
      %59 = dma.hbm_to_vmem [thread:$0]  %s3, 1024, %s54, [#allocation9], 128, 128, 8
    $region17: #{tpu_custom_call.1} parent=1 // pred_fallthru
      _
    // Predicated region
    $region18: #{tpu_custom_call.1} parent=1 // pred_check
      _
    $region19: #{tpu_custom_call.1} parent=1 // pred_check_branch
      %61 = sbr.rel (0) target = $region21
    $region20: #{tpu_custom_call.1} parent=1 // pred_region
      %s63 = ssub.s32 16, 16
      %64 = vsyncadd [#allocation9], %s63
      %s66 = sshll.u32 [#allocation10], 4
      %s67 = int_to_ptr.vmem [resolvable:$true] %s66
      %69 = dma.hbm_to_vmem [thread:$0]  %s4, 16, %s67, [#allocation9]
    $region21: #{tpu_custom_call.1} parent=1 // pred_fallthru
      _
    // Predicated region
    $region22: #{tpu_custom_call.1} parent=1 // pred_check
      _
    $region23: #{tpu_custom_call.1} parent=1 // pred_check_branch
      %71 = sbr.rel (0) target = $region25
    $region24: #{tpu_custom_call.1} parent=1 // pred_region
      %72 = dma.done [#allocation3], 256
    $region25: #{tpu_custom_call.1} parent=1 // pred_fallthru
      _
    // Predicated region
    $region26: #{tpu_custom_call.1} parent=1 // pred_check
      _
    $region27: #{tpu_custom_call.1} parent=1 // pred_check_branch
      %74 = sbr.rel (0) target = $region29
    $region28: #{tpu_custom_call.1} parent=1 // pred_region
      %75 = dma.done [#allocation6], 512
    $region29: #{tpu_custom_call.1} parent=1 // pred_fallthru
      _
    // Predicated region
    $region30: #{tpu_custom_call.1} parent=1 // pred_check
      _
    $region31: #{tpu_custom_call.1} parent=1 // pred_check_branch
      %77 = sbr.rel (0) target = $region33
    $region32: #{tpu_custom_call.1} parent=1 // pred_region
      %78 = dma.done [#allocation6], 16
    $region33: #{tpu_custom_call.1} parent=1 // pred_fallthru
      _
    // Predicated region
    $region34: #{tpu_custom_call.1} parent=1 // pred_check
      _
    $region35: #{tpu_custom_call.1} parent=1 // pred_check_branch
      %80 = sbr.rel (0) target = $region37
    $region36: #{tpu_custom_call.1} parent=1 // pred_region
      %81 = dma.done [#allocation9], 1024
    $region37: #{tpu_custom_call.1} parent=1 // pred_fallthru
      _
    // Predicated region
    $region38: #{tpu_custom_call.1} parent=1 // pred_check
      _
    $region39: #{tpu_custom_call.1} parent=1 // pred_check_branch
      %83 = sbr.rel (0) target = $region41
    $region40: #{tpu_custom_call.1} parent=1 // pred_region
      %84 = dma.done [#allocation9], 16
    $region41: #{tpu_custom_call.1} parent=1 // pred_fallthru
      _
    %v85 = vld [vmem:[#allocation2] sm:$0xff]
    %v86 = vld [vmem:[#allocation2 + $0x8] sm:$0xff]
    %v87 = vld [vmem:[#allocation5] sm:$0xff]
    %v88 = vld [vmem:[#allocation5 + $0x8] sm:$0xff]
    %v89 = vld [vmem:[#allocation5 + $0x10] sm:$0xff]
    %v90 = vld [vmem:[#allocation5 + $0x18] sm:$0xff]
    %v91 = vld [vmem:[#allocation7] sm:$0x1]
    %v93 = vlaneseq
    %v94 = vshrl.u32 %v93, 7
    %v95 = vsub.s32 0, %v94
    %v96 = vrot.slane %v91, %v95
    %vm98 = vcmask 261120
    %v100 = vsel %vm98, %v85, 0
    %v103 = vsel %vm98, %v86, 0
    %105 = vmatprep.subr.mxu0 0.0
    %106 = vmatpush1.msra.mxu0 %v87
    %107 = vmatprep.subr.mxu0 0.0
    %108 = vmatpush1.msra.mxu0 %v88
    %109 = vmatprep.subr.mxu0 0.0
    %110 = vmatpush1.msra.mxu0 %v89
    %111 = vmatprep.subr.mxu0 0.0
    %112 = vmatpush1.msra.mxu0 %v90
    %113 = vmatprep.subr.mxu0 0.0
    %114 = vmatpush1.msra.mxu0 0.0
    %115 = vmatprep.subr.mxu0 0.0
    %116 = vmatpush1.msra.mxu0 0.0
    %117 = vmatprep.subr.mxu0 0.0
    %118 = vmatpush1.msra.mxu0 0.0
    %119 = vmatprep.subr.mxu0 0.0
    %120 = vmatpush1.msra.mxu0 0.0
    %121 = vmatprep.subr.mxu0 0.0
    %122 = vmatpush1.msra.mxu0 0.0
    %123 = vmatprep.subr.mxu0 0.0
    %124 = vmatpush1.msra.mxu0 0.0
    %125 = vmatprep.subr.mxu0 0.0
    %126 = vmatpush1.msra.mxu0 0.0
    %127 = vmatprep.subr.mxu0 0.0
    %128 = vmatpush1.msra.mxu0 0.0
    %129 = vmatprep.subr.mxu0 0.0
    %130 = vmatpush1.msra.mxu0 0.0
    %131 = vmatprep.subr.mxu0 0.0
    %132 = vmatpush1.msra.mxu0 0.0
    %133 = vmatprep.subr.mxu0 0.0
    %134 = vmatpush1.msra.mxu0 0.0
    %135 = vmatprep.subr.mxu0 0.0
    %136 = vmatpush1.msra.mxu0 0.0
    %137 = vmatprep.subr.mxu0 0.0
    %138 = vmatpush1.msra.mxu0 0.0
    %139 = vmatprep.subr.mxu0 0.0
    %140 = vmatpush1.msra.mxu0 0.0
    %141 = vmatprep.subr.mxu0 0.0
    %142 = vmatpush1.msra.mxu0 0.0
    %143 = vmatprep.subr.mxu0 0.0
    %144 = vmatpush1.msra.mxu0 0.0
    %145 = vmatprep.subr.mxu0 0.0
    %146 = vmatpush1.msra.mxu0 0.0
    %147 = vmatprep.subr.mxu0 0.0
    %148 = vmatpush1.msra.mxu0 0.0
    %149 = vmatprep.subr.mxu0 0.0
    %150 = vmatpush1.msra.mxu0 0.0
    %151 = vmatprep.subr.mxu0 0.0
    %152 = vmatpush1.msra.mxu0 0.0
    %153 = vmatprep.subr.mxu0 0.0
    %154 = vmatpush1.msra.mxu0 0.0
    %155 = vmatprep.subr.mxu0 0.0
    %156 = vmatpush1.msra.mxu0 0.0
    %157 = vmatprep.subr.mxu0 0.0
    %158 = vmatpush1.msra.mxu0 0.0
    %159 = vmatprep.subr.mxu0 0.0
    %160 = vmatpush1.msra.mxu0 0.0
    %161 = vmatprep.subr.mxu0 0.0
    %162 = vmatpush1.msra.mxu0 0.0
    %163 = vmatprep.subr.mxu0 0.0
    %164 = vmatpush1.msra.mxu0 0.0
    %165 = vmatprep.subr.mxu0 0.0
    %166 = vmatpush1.msra.mxu0 0.0
    %167 = vmatprep.subr.mxu0 0.0
    %168 = vmatpush1.msra.mxu0 0.0
    %169 = vmatprep.mubr.f32.mxu0 0.0
    %170 = vmatmul.mubr.f32.gmra.mrb[0].mxu0 %v100
    %v171 = vpop.f32.mrb[0].mxu0
    %v172 = vadd.f32 %v96, %v171
    %v173 = vpop.f32.mrb[0].mxu0
    %174 = vmatprep.mubr.f32.mxu0 0.0
    %175 = vmatmul.mubr.f32.gmra.mrb[0].mxu0 %v103
    %v176 = vpop.f32.mrb[0].mxu0
    %v177 = vadd.f32 %v96, %v176
    %v178 = vpop.f32.mrb[0].mxu0
    %179 = vdwg.mxu0
    %v180 = vmax.f32 %v172, 0.0
    %v181 = vmax.f32 %v177, 0.0
    %v182 = vld [vmem:[#allocation8] sm:$0xff]
    %v183 = vld [vmem:[#allocation8 + $0x8] sm:$0xff]
    %v184 = vld [vmem:[#allocation8 + $0x10] sm:$0xff]
    %v185 = vld [vmem:[#allocation8 + $0x18] sm:$0xff]
    %v186 = vld [vmem:[#allocation8 + $0x20] sm:$0xff]
    %v187 = vld [vmem:[#allocation8 + $0x28] sm:$0xff]
    %v188 = vld [vmem:[#allocation8 + $0x30] sm:$0xff]
    %v189 = vld [vmem:[#allocation8 + $0x38] sm:$0xff]
    %v190 = vld [vmem:[#allocation10] sm:$0x1]
    %v192 = vlaneseq
    %v193 = vshrl.u32 %v192, 7
    %v194 = vsub.s32 0, %v193
    %v195 = vrot.slane %v190, %v194
    %vm197 = vcmask 523264
    %v199 = vsel %vm197, %v180, 0
    %v202 = vsel %vm197, %v181, 0
    %204 = vmatprep.subr.mxu0 0.0
    %205 = vmatpush1.msra.mxu0 %v182
    %206 = vmatprep.subr.mxu0 0.0
    %207 = vmatpush1.msra.mxu0 %v183
    %208 = vmatprep.subr.mxu0 0.0
    %209 = vmatpush1.msra.mxu0 %v184
    %210 = vmatprep.subr.mxu0 0.0
    %211 = vmatpush1.msra.mxu0 %v185
    %212 = vmatprep.subr.mxu0 0.0
    %213 = vmatpush1.msra.mxu0 %v186
    %214 = vmatprep.subr.mxu0 0.0
    %215 = vmatpush1.msra.mxu0 %v187
    %216 = vmatprep.subr.mxu0 0.0
    %217 = vmatpush1.msra.mxu0 %v188
    %218 = vmatprep.subr.mxu0 0.0
    %219 = vmatpush1.msra.mxu0 %v189
    %220 = vmatprep.subr.mxu0 0.0
    %221 = vmatpush1.msra.mxu0 0.0
    %222 = vmatprep.subr.mxu0 0.0
    %223 = vmatpush1.msra.mxu0 0.0
    %224 = vmatprep.subr.mxu0 0.0
    %225 = vmatpush1.msra.mxu0 0.0
    %226 = vmatprep.subr.mxu0 0.0
    %227 = vmatpush1.msra.mxu0 0.0
    %228 = vmatprep.subr.mxu0 0.0
    %229 = vmatpush1.msra.mxu0 0.0
    %230 = vmatprep.subr.mxu0 0.0
    %231 = vmatpush1.msra.mxu0 0.0
    %232 = vmatprep.subr.mxu0 0.0
    %233 = vmatpush1.msra.mxu0 0.0
    %234 = vmatprep.subr.mxu0 0.0
    %235 = vmatpush1.msra.mxu0 0.0
    %236 = vmatprep.subr.mxu0 0.0
    %237 = vmatpush1.msra.mxu0 0.0
    %238 = vmatprep.subr.mxu0 0.0
    %239 = vmatpush1.msra.mxu0 0.0
    %240 = vmatprep.subr.mxu0 0.0
    %241 = vmatpush1.msra.mxu0 0.0
    %242 = vmatprep.subr.mxu0 0.0
    %243 = vmatpush1.msra.mxu0 0.0
    %244 = vmatprep.subr.mxu0 0.0
    %245 = vmatpush1.msra.mxu0 0.0
    %246 = vmatprep.subr.mxu0 0.0
    %247 = vmatpush1.msra.mxu0 0.0
    %248 = vmatprep.subr.mxu0 0.0
    %249 = vmatpush1.msra.mxu0 0.0
    %250 = vmatprep.subr.mxu0 0.0
    %251 = vmatpush1.msra.mxu0 0.0
    %252 = vmatprep.subr.mxu0 0.0
    %253 = vmatpush1.msra.mxu0 0.0
    %254 = vmatprep.subr.mxu0 0.0
    %255 = vmatpush1.msra.mxu0 0.0
    %256 = vmatprep.subr.mxu0 0.0
    %257 = vmatpush1.msra.mxu0 0.0
    %258 = vmatprep.subr.mxu0 0.0
    %259 = vmatpush1.msra.mxu0 0.0
    %260 = vmatprep.subr.mxu0 0.0
    %261 = vmatpush1.msra.mxu0 0.0
    %262 = vmatprep.subr.mxu0 0.0
    %263 = vmatpush1.msra.mxu0 0.0
    %264 = vmatprep.subr.mxu0 0.0
    %265 = vmatpush1.msra.mxu0 0.0
    %266 = vmatprep.subr.mxu0 0.0
    %267 = vmatpush1.msra.mxu0 0.0
    %268 = vmatprep.mubr.f32.mxu0 0.0
    %269 = vmatmul.mubr.f32.gmra.mrb[0].mxu0 %v199
    %v270 = vpop.f32.mrb[0].mxu0
    %v271 = vadd.f32 %v195, %v270
    %v272 = vpop.f32.mrb[0].mxu0
    %273 = vmatprep.mubr.f32.mxu0 0.0
    %274 = vmatmul.mubr.f32.gmra.mrb[0].mxu0 %v202
    %v275 = vpop.f32.mrb[0].mxu0
    %v276 = vadd.f32 %v195, %v275
    %v277 = vpop.f32.mrb[0].mxu0
    %278 = vdwg.mxu0
    %279 = vst.msk [vmem:[#allocation11] sm:$0xff] %vm98, %v271
    %280 = vst.msk [vmem:[#allocation11 + $0x8] sm:$0xff] %vm98, %v276
    // Predicated region
    $region42: #{tpu_custom_call.1} parent=1 // pred_check
      _
    $region43: #{tpu_custom_call.1} parent=1 // pred_check_branch
      %282 = sbr.rel (0) target = $region45
    $region44: #{tpu_custom_call.1} parent=1 // pred_region
      %s284 = ssub.s32 256, 256
      %285 = vsyncadd [#allocation4], %s284
      %s286 = sshll.u32 [#allocation11], 4
      %s287 = int_to_ptr.vmem [resolvable:$true] %s286
      %292 = dma.vmem_to_hbm [thread:$0]  %s287, 256, %s5, [#allocation4], 128, 128, 8
    $region45: #{tpu_custom_call.1} parent=1 // pred_fallthru
      _
    // Predicated region
    $region46: #{tpu_custom_call.1} parent=1 // pred_check
      _
    $region47: #{tpu_custom_call.1} parent=1 // pred_check_branch
      %294 = sbr.rel (0) target = $region49
    $region48: #{tpu_custom_call.1} parent=1 // pred_region
      %295 = dma.done [#allocation4], 256
    $region49: #{tpu_custom_call.1} parent=1 // pred_fallthru
      _
    %296 = vsyncpa [#allocation3], 1
    %297 = vsyncpa [#allocation6], 1
    %298 = vsyncpa [#allocation9], 1
    %299 = vsyncpa [#allocation4], 1

</llo_original>
